<compile_context>
chip_gen: v5e
topology: v5e:2x2
jax: 0.10.0
libtpu: 0.0.40
codegen_flags: <defaults>
</compile_context>

<pallas_src>
import jax
import jax.numpy as jnp
from jax.experimental import pallas as pl
from jax.experimental.pallas import tpu as pltpu


def _mlp_kernel(x_ref, w1_ref, b1_ref, w2_ref, b2_ref, o_ref):
    # x_ref : (TB, In)  batch tile, native row-major
    # w1_ref: (H, In)   native nn.Linear (out_features, in_features) layout
    # b1_ref: (H, 1)    bias column
    # w2_ref: (H, 1)    nn.Linear (1, H) reshaped once at init (free reshape)
    # b2_ref: (1,)      scalar bias in SMEM
    # o_ref : (1, TB)   batch on lanes (lane-dense store)

    # Layer 1 on the MXU: h^T = w1 @ x^T -> (H, TB), f32 accumulation.
    ht = jax.lax.dot_general(
        w1_ref[...], x_ref[...],
        dimension_numbers=(((1,), (1,)), ((), ())),
        preferred_element_type=jnp.float32,
    )
    # Bias (broadcast over lanes) + ReLU on the VPU, kept in f32.
    ht = jnp.maximum(ht + b1_ref[...], 0.0)

    # Layer 2 (out_features == 1): VPU multiply + XLU sublane reduce -> (1, TB).
    y = jnp.sum(ht * w2_ref[...], axis=0, keepdims=True)
    y = y + b2_ref[0]

    o_ref[...] = jax.nn.sigmoid(y).astype(o_ref.dtype)


def prepare_params(w1, b1, w2, b2):
    """One-time layout prep, hoisted out of the per-call forward path.

    w1 stays in native (hidden, input); b1 -> (hidden, 1) column;
    w2 (1, hidden) -> (hidden, 1) column (contiguous reshape, free);
    b2 -> (1,) scalar destined for SMEM.
    """
    return w1, b1.reshape(-1, 1), w2.reshape(-1, 1), b2.reshape(-1)


@jax.jit
def nn1_forward(x, w1, b1_col, w2_col, b2):
    """x: (B, input_size); params pre-laid-out by prepare_params(). Returns (B, 1)."""
    B, In = x.shape
    H = w1.shape[0]

    # Batch tile: full batch for small problems; 512-row lane-dense tiles for
    # large batches (keeps BlockSpec auto-pipelining overlapping the x DMA with
    # compute and stays well inside v7x's 32 MiB scoped VMEM).
    if B > 512 and B % 512 == 0:
        TB = 512
    else:
        TB = B  # TODO(synk): pad batch to a multiple of 512 for large, ragged B.
    grid = (pl.cdiv(B, TB),)

    out_t = pl.pallas_call(
        _mlp_kernel,
        out_shape=jax.ShapeDtypeStruct((1, B), x.dtype),
        grid=grid,
        in_specs=[
            pl.BlockSpec((TB, In), lambda i: (i, 0)),   # x: tiled over batch
            pl.BlockSpec((H, In), lambda i: (0, 0)),    # w1: resident full block
            pl.BlockSpec((H, 1), lambda i: (0, 0)),     # b1 column: resident
            pl.BlockSpec((H, 1), lambda i: (0, 0)),     # w2 column: resident
            pl.BlockSpec(memory_space=pltpu.SMEM),      # b2 scalar in SMEM
        ],
        out_specs=pl.BlockSpec((1, TB), lambda i: (0, i)),
        compiler_params=pltpu.CompilerParams(
            dimension_semantics=("arbitrary",),
        ),
    )(x, w1, b1_col, w2_col, b2)

    # (1, B) -> (B, 1): contiguous reshape, fused under jit (no extra dispatch).
    return out_t.reshape(B, 1)


if __name__ == "__main__":
    input_size = 32
    hidden_size = 32
    batch = 8

    key = jax.random.PRNGKey(0)
    kx, kw1, kb1, kw2, kb2 = jax.random.split(key, 5)

    x = jax.random.normal(kx, (batch, input_size), dtype=jnp.float32)

    # Deterministic init mimicking nn.Linear's uniform(-1/sqrt(fan_in), 1/sqrt(fan_in)).
    lim1 = 1.0 / (input_size ** 0.5)
    w1 = jax.random.uniform(kw1, (hidden_size, input_size), jnp.float32, -lim1, lim1)
    b1 = jax.random.uniform(kb1, (hidden_size,), jnp.float32, -lim1, lim1)
    lim2 = 1.0 / (hidden_size ** 0.5)
    w2 = jax.random.uniform(kw2, (1, hidden_size), jnp.float32, -lim2, lim2)
    b2 = jax.random.uniform(kb2, (1,), jnp.float32, -lim2, lim2)

    # One-time layout prep (hoisted out of the forward hot path).
    params = prepare_params(w1, b1, w2, b2)

    out = nn1_forward(x, *params)
    jax.block_until_ready(out)

    # Pure-JAX reference check (same math, outside Pallas).
    ref = jax.nn.sigmoid(jnp.maximum(x @ w1.T + b1, 0.0) @ w2.T + b2)
    assert out.shape == (batch, 1)
    assert jnp.allclose(out, ref, atol=1e-5, rtol=1e-5)

    print("KERNEL_OK")
</pallas_src>

<mosaic_0001>
module attributes {stable_mosaic.version = 11 : i64} {
  func.func @_mlp_kernel(%arg0: i32, %arg1: memref<8x32xf32, #tpu.memory_space<vmem>>, %arg2: memref<32x32xf32, #tpu.memory_space<vmem>>, %arg3: memref<32x1xf32, #tpu.memory_space<vmem>>, %arg4: memref<32x1xf32, #tpu.memory_space<vmem>>, %arg5: memref<1xf32, #tpu.memory_space<smem>>, %arg6: memref<1x8xf32, #tpu.memory_space<vmem>>) attributes {dimension_semantics = [#tpu.dimension_semantics<arbitrary>], iteration_bounds = array<i64: 1>, scalar_prefetch = 0 : i64, scratch_operands = 0 : i64, tpu.core_type = #tpu.core_type<tc>, window_params = [{transform_indices = @transform_0, window_bounds = array<i64: 8, 32>}, {pipeline_mode = #tpu.pipeline_mode<synchronous>, transform_indices = @transform_1, window_bounds = array<i64: 32, 32>}, {pipeline_mode = #tpu.pipeline_mode<synchronous>, transform_indices = @transform_2, window_bounds = array<i64: 32, 1>}, {pipeline_mode = #tpu.pipeline_mode<synchronous>, transform_indices = @transform_3, window_bounds = array<i64: 32, 1>}, {transform_indices = @transform_4, window_bounds = array<i64: 1>}, {transform_indices = @transform_5, window_bounds = array<i64: 1, 8>}]} {
    %c0 = arith.constant 0 : index
    %c0_0 = arith.constant 0 : index
    %0 = vector.load %arg2[%c0, %c0_0] : memref<32x32xf32, #tpu.memory_space<vmem>>, vector<32x32xf32>
    %c0_1 = arith.constant 0 : index
    %c0_2 = arith.constant 0 : index
    %1 = vector.load %arg1[%c0_1, %c0_2] : memref<8x32xf32, #tpu.memory_space<vmem>>, vector<8x32xf32>
    %cst = arith.constant dense<0.000000e+00> : vector<32x8xf32>
    %2 = tpu.matmul %0, %1, %cst {dimension_numbers = #tpu.dot_dimension_numbers<[1], [1], [0], [0], [0, 0, 1, 0], [], []>} : vector<32x32xf32>, vector<8x32xf32>, vector<32x8xf32> -> vector<32x8xf32>
    %c0_3 = arith.constant 0 : index
    %c0_4 = arith.constant 0 : index
    %3 = vector.load %arg3[%c0_3, %c0_4] : memref<32x1xf32, #tpu.memory_space<vmem>>, vector<32x1xf32>
    %4 = vector.broadcast %3 : vector<32x1xf32> to vector<32x8xf32>
    %5 = arith.addf %2, %4 : vector<32x8xf32>
    %cst_5 = arith.constant 0.000000e+00 : f32
    %6 = vector.broadcast %cst_5 : f32 to vector<32x8xf32>
    %7 = arith.maximumf %5, %6 : vector<32x8xf32>
    %c0_6 = arith.constant 0 : index
    %c0_7 = arith.constant 0 : index
    %8 = vector.load %arg4[%c0_6, %c0_7] : memref<32x1xf32, #tpu.memory_space<vmem>>, vector<32x1xf32>
    %9 = vector.broadcast %8 : vector<32x1xf32> to vector<32x8xf32>
    %10 = arith.mulf %7, %9 : vector<32x8xf32>
    %cst_8 = arith.constant dense<0.000000e+00> : vector<8xf32>
    %11 = vector.multi_reduction <add>, %10, %cst_8 [0] : vector<32x8xf32> to vector<8xf32>
    %12 = vector.shape_cast %11 : vector<8xf32> to vector<1x8xf32>
    %c0_9 = arith.constant 0 : index
    %13 = memref.load %arg5[%c0_9] : memref<1xf32, #tpu.memory_space<smem>>
    %14 = vector.broadcast %13 : f32 to vector<1x8xf32>
    %15 = arith.addf %12, %14 : vector<1x8xf32>
    %16 = arith.negf %15 : vector<1x8xf32>
    %17 = math.exp %16 : vector<1x8xf32>
    %cst_10 = arith.constant 1.000000e+00 : f32
    %18 = vector.broadcast %cst_10 : f32 to vector<1x8xf32>
    %19 = arith.addf %18, %17 : vector<1x8xf32>
    %20 = arith.divf %18, %19 : vector<1x8xf32>
    %c0_11 = arith.constant 0 : index
    %c0_12 = arith.constant 0 : index
    %21 = vector.load %arg6[%c0_11, %c0_12] : memref<1x8xf32, #tpu.memory_space<vmem>>, vector<1x8xf32>
    tpu.vector_store %arg6[%c0_11, %c0_12], %20 {strides = array<i32>} : memref<1x8xf32, #tpu.memory_space<vmem>>, vector<1x8xf32>,
    return
  }
  func.func @transform_0(%arg0: i32) -> (i32, i32) {
    %c0_i32 = arith.constant 0 : i32
    %c0_i32_0 = arith.constant 0 : i32
    return %arg0, %c0_i32 : i32, i32
  }
  func.func @transform_1(%arg0: i32) -> (i32, i32) {
    %c0_i32 = arith.constant 0 : i32
    %c0_i32_0 = arith.constant 0 : i32
    %c0_i32_1 = arith.constant 0 : i32
    return %c0_i32, %c0_i32_0 : i32, i32
  }
  func.func @transform_2(%arg0: i32) -> (i32, i32) {
    %c0_i32 = arith.constant 0 : i32
    %c0_i32_0 = arith.constant 0 : i32
    %c0_i32_1 = arith.constant 0 : i32
    return %c0_i32, %c0_i32_0 : i32, i32
  }
  func.func @transform_3(%arg0: i32) -> (i32, i32) {
    %c0_i32 = arith.constant 0 : i32
    %c0_i32_0 = arith.constant 0 : i32
    %c0_i32_1 = arith.constant 0 : i32
    return %c0_i32, %c0_i32_0 : i32, i32
  }
  func.func @transform_4(%arg0: i32) -> i32 {
    %c0_i32 = arith.constant 0 : i32
    %c0_i32_0 = arith.constant 0 : i32
    return %c0_i32 : i32
  }
  func.func @transform_5(%arg0: i32) -> (i32, i32) {
    %c0_i32 = arith.constant 0 : i32
    %c0_i32_0 = arith.constant 0 : i32
    return %c0_i32, %arg0 : i32, i32
  }
}

</mosaic_0001>

<llo_original>
// kernel: nn1_forward.1
$region0: #{nn1_forward.1}
  #allocation0 [shape = 'u32[]', space=smem, size = 0x4, offset = 0x4, fixed_abs, tag = 'smem constant byte address 0x4 - core index']
  #allocation1 [shape = 'u32[72,128]{1,0:T(1,128)}', space=vmem, size = 0x9000, scoped, tag = 'internal scratch']
  #allocation2 [shape = 'f32[1]{0:T(128)S(6)}', space=smem, size = 0x200, scoped, tag = 'scoped memory for nn1_forward.1']
  %s0 = inlined_call_operand.vmem [shape: f32[8,32], index: 0, kind: input, shape index: {}]
  %s1 = inlined_call_operand.vmem [shape: f32[32,32], index: 1, kind: input, shape index: {}]
  %s2 = inlined_call_operand.vmem [shape: f32[32,1], index: 2, kind: input, shape index: {}]
  %s3 = inlined_call_operand.vmem [shape: f32[32,1], index: 3, kind: input, shape index: {}]
  %s4 = inlined_call_operand.<no memory space> [shape: f32[1], index: 4, kind: input, shape index: {}]
  %s5 = inlined_call_operand.hbm [shape: f32[1,8], index: 5, kind: output, shape index: {}]
  %s6 = sld [smem:[#allocation0]]
  $region30: #{nn1_forward.1} parent=0
    _
  %s8 = ssub.s32 1, %s6
  %s9 = scalar_select 0, %s8, %s6
  %10 = sst [smem:[#allocation2]] %s4
  $region1: #{nn1_forward.1} parent=0
    #allocation3 [shape = 'u8[512]{0}', space=vmem, size = 0x400, scoped, tag = 'output window, operand 0, single buffered']
    #allocation4 [shape = 's32[1]{0}', space=sflag, size = 0x4, scoped, tag = 'scoped memory for nn1_forward.1']
    %11 = vsyncpa [#allocation4], 0
    // Predicated region
    $region2: #{nn1_forward.1} parent=1 // pred_check
      _
    $region3: #{nn1_forward.1} parent=1 // pred_check_branch
      %13 = sbr.rel (0) target = $region5
    $region4: #{nn1_forward.1} parent=1 // pred_region
      _
    $region5: #{nn1_forward.1} parent=1 // pred_fallthru
      _
    // Predicated region
    $region6: #{nn1_forward.1} parent=1 // pred_check
      _
    $region7: #{nn1_forward.1} parent=1 // pred_check_branch
      %15 = sbr.rel (0) target = $region9
    $region8: #{nn1_forward.1} parent=1 // pred_region
      _
    $region9: #{nn1_forward.1} parent=1 // pred_fallthru
      _
    // Predicated region
    $region10: #{nn1_forward.1} parent=1 // pred_check
      _
    $region11: #{nn1_forward.1} parent=1 // pred_check_branch
      %17 = sbr.rel (0) target = $region13
    $region12: #{nn1_forward.1} parent=1 // pred_region
      _
    $region13: #{nn1_forward.1} parent=1 // pred_fallthru
      _
    // Predicated region
    $region14: #{nn1_forward.1} parent=1 // pred_check
      _
    $region15: #{nn1_forward.1} parent=1 // pred_check_branch
      %19 = sbr.rel (0) target = $region17
    $region16: #{nn1_forward.1} parent=1 // pred_region
      _
    $region17: #{nn1_forward.1} parent=1 // pred_fallthru
      _
    // Predicated region
    $region18: #{nn1_forward.1} parent=1 // pred_check
      _
    $region19: #{nn1_forward.1} parent=1 // pred_check_branch
      %21 = sbr.rel (0) target = $region21
    $region20: #{nn1_forward.1} parent=1 // pred_region
      _
    $region21: #{nn1_forward.1} parent=1 // pred_fallthru
      _
    %v22 = vld [vmem:[%s1] sm:$0xff]
    %v23 = vld [vmem:[%s1 + $0x8] sm:$0xff]
    %v24 = vld [vmem:[%s1 + $0x10] sm:$0xff]
    %v25 = vld [vmem:[%s1 + $0x18] sm:$0xff]
    %v26 = vld [vmem:[%s0] sm:$0xff]
    %v27 = vld [vmem:[%s2] sm:$0xff]
    %v28 = vld [vmem:[%s2 + $0x8] sm:$0xff]
    %v29 = vld [vmem:[%s2 + $0x10] sm:$0xff]
    %v30 = vld [vmem:[%s2 + $0x18] sm:$0xff]
    %32 = vset.pattern.permute.xlu0 0
    %33 = vperm.xlu0 %32, %v27
    %v34 = vpop.permute.xlu0 %33
    %37 = vset.pattern.permute.xlu0 0
    %38 = vperm.xlu0 %37, %v28
    %v39 = vpop.permute.xlu0 %38
    %42 = vset.pattern.permute.xlu0 0
    %43 = vperm.xlu0 %42, %v29
    %v44 = vpop.permute.xlu0 %43
    %47 = vset.pattern.permute.xlu0 0
    %48 = vperm.xlu0 %47, %v30
    %v49 = vpop.permute.xlu0 %48
    %vm51 = vcmask 261120
    %v53 = vsel %vm51, %v22, 0
    %v56 = vsel %vm51, %v23, 0
    %v59 = vsel %vm51, %v24, 0
    %v62 = vsel %vm51, %v25, 0
    %v65 = vsel %vm51, %v26, 0
    %67 = vmatpush.xpose.msra.mxu0 0.0
    %68 = vmatpush.xpose.msra.mxu0 0.0
    %69 = vmatpush.xpose.msra.mxu0 0.0
    %70 = vmatpush.xpose.msra.mxu0 0.0
    %71 = vmatpush.xpose.msra.mxu0 0.0
    %72 = vmatpush.xpose.msra.mxu0 0.0
    %73 = vmatpush.xpose.msra.mxu0 0.0
    %74 = vmatpush.xpose.msra.mxu0 0.0
    %75 = vmatpush.xpose.msra.mxu0 0.0
    %76 = vmatpush.xpose.msra.mxu0 0.0
    %77 = vmatpush.xpose.msra.mxu0 0.0
    %78 = vmatpush.xpose.msra.mxu0 0.0
    %79 = vmatpush.xpose.msra.mxu0 0.0
    %80 = vmatpush.xpose.msra.mxu0 0.0
    %81 = vmatpush.xpose.msra.mxu0 0.0
    %82 = vmatpush.xpose.msra.mxu0 %v65
    %83 = vmatmul.f32.gmra.mxu0 %v53
    %v84 = vpop.f32.mrf.mxu0
    %v85 = vadd.f32 %v34, %v84
    %86 = vmatmul.f32.gmra.mxu0 %v56
    %v87 = vpop.f32.mrf.mxu0
    %v88 = vadd.f32 %v39, %v87
    %89 = vmatmul.f32.gmra.mxu0 %v59
    %v90 = vpop.f32.mrf.mxu0
    %v91 = vadd.f32 %v44, %v90
    %92 = vmatmul.f32.gmra.mxu0 %v62
    %v93 = vpop.f32.mrf.mxu0
    %v94 = vadd.f32 %v49, %v93
    %95 = vdwg.mxu0
    %v96 = vmax.f32 %v85, 0.0
    %v97 = vmax.f32 %v88, 0.0
    %v98 = vmax.f32 %v91, 0.0
    %v99 = vmax.f32 %v94, 0.0
    %v100 = vld [vmem:[%s3] sm:$0xff]
    %v101 = vld [vmem:[%s3 + $0x8] sm:$0xff]
    %v102 = vld [vmem:[%s3 + $0x10] sm:$0xff]
    %v103 = vld [vmem:[%s3 + $0x18] sm:$0xff]
    %105 = vset.pattern.permute.xlu0 0
    %106 = vperm.xlu0 %105, %v100
    %v107 = vpop.permute.xlu0 %106
    %110 = vset.pattern.permute.xlu0 0
    %111 = vperm.xlu0 %110, %v101
    %v112 = vpop.permute.xlu0 %111
    %115 = vset.pattern.permute.xlu0 0
    %116 = vperm.xlu0 %115, %v102
    %v117 = vpop.permute.xlu0 %116
    %120 = vset.pattern.permute.xlu0 0
    %121 = vperm.xlu0 %120, %v103
    %v122 = vpop.permute.xlu0 %121
    %v124 = vmul.f32 %v96, %v107
    %v125 = vmul.f32 %v97, %v112
    %v126 = vmul.f32 %v98, %v117
    %v127 = vmul.f32 %v99, %v122
    %vm128 = vcmask 64512
    %v129 = vsel %vm128, %v124, 0.0
    %v130 = vsel %vm128, %v125, 0.0
    %v131 = vadd.f32 %v129, %v130
    %v132 = vsel %vm128, %v126, 0.0
    %v133 = vadd.f32 %v131, %v132
    %v134 = vsel %vm128, %v127, 0.0
    %v135 = vadd.f32 %v133, %v134
    %v136 = vrot.slane %v135, 4
    %v137 = vadd.f32 %v135, %v136
    %v138 = vrot.slane %v137, 2
    %v139 = vadd.f32 %v137, %v138
    %v140 = vrot.slane %v139, 1
    %v141 = vadd.f32 %v139, %v140
    %s142 = sld [smem:[#allocation2]]
    %v143 = vstv %s142
    %v144 = vadd.f32 %v141, %v143
    %v145 = vxor.u32 %v144, 2147483648
    %v146 = vmul.f32 %v145, 1.442695
    %v147 = vpow.pop %v146
    %v148 = vadd.f32 %v147, 1.0
    %v149 = vrcp.pop %v148
    %v150 = vmul.f32 %v148, %v149
    %v151 = vsub.f32 1.0, %v150
    %v152 = vmul.f32 %v149, %v151
    %v153 = vadd.f32 %v149, %v152
    %vm154 = vweird.f32 %v148
    %vm155 = vweird.f32 %v149
    %vm156 = vmor %vm154, %vm155
    %v157 = vsel %vm156, %v149, %v153
    %v158 = vand.u32 2147483647, %v148
    %vm159 = vcmp.eq.f32.partialorder %v158, 8.507059e+37
    %v160 = vand.u32 %v148, 2147483648
    %v161 = vor.u32 1.1754944e-38, %v160
    %v162 = vsel %vm159, %v161, %v157
    %v163 = vmul.f32 1.0, %v162
    %vm164 = vcmask 57344
    %165 = vst.msk [vmem:[#allocation3] sm:$0x1] %vm164, %v163
    // Predicated region
    $region22: #{nn1_forward.1} parent=1 // pred_check
      _
    $region23: #{nn1_forward.1} parent=1 // pred_check_branch
      %167 = sbr.rel (0) target = $region25
    $region24: #{nn1_forward.1} parent=1 // pred_region
      %169 = vsyncadd [#allocation4], 0
      %s171 = sshll.u32 [#allocation3], 4
      %s172 = int_to_ptr.vmem [resolvable:$true] %s171
      %s173 = sshll.u32 %s5, 4
      %s174 = int_to_ptr.hbm [resolvable:$true] %s173
      %176 = dma.vmem_to_hbm [thread:$0]  %s172, 16, %s174, [#allocation4]
    $region25: #{nn1_forward.1} parent=1 // pred_fallthru
      _
    // Predicated region
    $region26: #{nn1_forward.1} parent=1 // pred_check
      _
    $region27: #{nn1_forward.1} parent=1 // pred_check_branch
      %178 = sbr.rel (0) target = $region29
    $region28: #{nn1_forward.1} parent=1 // pred_region
      %180 = dma.done [#allocation4], 16
    $region29: #{nn1_forward.1} parent=1 // pred_fallthru
      _
    %181 = vsyncpa [#allocation4], 1

</llo_original>
